<compile_context>
chip_gen: v7x
topology: tpu7x:2x2x1
jax: 0.10.0
libtpu: 0.0.40
codegen_flags: <defaults>
</compile_context>

<pallas_src>
import functools

import jax
import jax.numpy as jnp
from jax.experimental import pallas as pl
from jax.experimental.pallas import tpu as pltpu


LANES = 128  # MXU/lane width used for the resident (padded) classifier head


def _round_up(n, m):
    return ((n + m - 1) // m) * m


def classifier_kernel(x_ref, w1_ref, b1_ref, w2_ref, b2_ref, o_ref, *, num_classes):
    # Hot path: two matmuls + bias + ReLU, fused per batch tile, weights resident.
    x = x_ref[...]                                    # (TB, D_in), f32 or bf16

    # First layer: MXU matmul with f32 accumulation, f32 epilogue (bias + ReLU).
    h = jnp.dot(x, w1_ref[...], preferred_element_type=jnp.float32)      # (TB, H)
    h = jnp.maximum(h + b1_ref[...], 0.0)

    # Dropout(0.3) -> identity in eval mode.

    # Second layer: cast activations to the weight dtype only for the MXU input;
    # accumulate in f32, add bias in f32 on the full 128-lane tile, then store
    # only the `num_classes` useful lanes (narrow, contiguous HBM writeback).
    out = jnp.dot(h.astype(w2_ref.dtype), w2_ref[...],
                  preferred_element_type=jnp.float32)                     # (TB, 128)
    out = out + b2_ref[...]
    o_ref[...] = out[:, :num_classes].astype(o_ref.dtype)                 # (TB, C)


@functools.partial(jax.jit, static_argnames=("tb", "use_bf16"))
def classifier_forward(x, w1, b1, w2, b2, *, tb=4096, use_bf16=False):
    """x: (B, D_in).  w1: (D_in, H), b1: (1, H), w2: (H, C), b2: (1, C)."""
    B, D_in = x.shape
    H = w1.shape[1]
    C = w2.shape[1]
    assert w1.shape == (D_in, H) and b1.shape == (1, H)
    assert w2.shape == (H, C) and b2.shape == (1, C)

    # --- Resident, MXU-friendly classifier head: pad w2/b2 to 128 lanes (VMEM only;
    #     the HBM output stays C-wide). ---
    Cp = max(LANES, _round_up(C, LANES))
    w2p = jnp.zeros((H, Cp), w2.dtype).at[:, :C].set(w2)
    b2p = jnp.zeros((1, Cp), jnp.float32).at[:, :C].set(b2.astype(jnp.float32))
    b1 = b1.astype(jnp.float32)

    # --- Compute dtype: bf16 MXU path (v5e/v6e/v7x all take bf16 on the MXU);
    #     accumulation and epilogue stay f32. ---
    compute_dtype = jnp.bfloat16 if (use_bf16 or x.dtype == jnp.bfloat16) else jnp.float32
    if x.dtype != compute_dtype:
        # TODO(synk): in production the upstream producer should emit bf16 x
        # directly; this in-wrapper cast is an extra HBM pass over x.
        x = x.astype(compute_dtype)
    w1 = w1.astype(compute_dtype)
    w2p = w2p.astype(compute_dtype)

    # --- Batch tiling: no jnp.pad of x; Pallas masks the partial final block. ---
    TB = min(tb, _round_up(B, 8))                 # sublane-aligned tile
    if B > 8 and pl.cdiv(B, TB) < 2:
        # Guarantee >=2 grid steps so the "parallel" axis can shard across both
        # v7x TensorCores (harmless elsewhere).
        TB = min(TB, _round_up(pl.cdiv(B, 2), 8))
    n_tiles = pl.cdiv(B, TB)

    elem_x = jnp.dtype(compute_dtype).itemsize
    elem_w = elem_x

    # Accurate (narrow-output, no-pad) cost hint for XLA's scheduler.
    cost = pl.CostEstimate(
        flops=2 * B * (D_in * H + H * Cp),
        transcendentals=0,
        bytes_accessed=(B * D_in * elem_x                 # x read
                        + D_in * H * elem_w + H * 4       # w1 + b1
                        + H * Cp * elem_w + Cp * 4        # w2 (padded, VMEM) + b2
                        + B * C * 4),                     # narrow logits write
    )

    # VMEM budget: double-buffered x/out blocks + (double-buffered) resident
    # weights + in-kernel f32 temporaries (h and the 128-wide pre-slice logits).
    vmem_est = (2 * TB * D_in * elem_x
                + 2 * TB * C * 4
                + 2 * (D_in * H + H * Cp) * elem_w + 2 * (H + Cp) * 4
                + TB * H * 4 + TB * Cp * 4)
    vmem_limit = int(min(max(2 * vmem_est, 32 << 20), 48 << 20))

    out = pl.pallas_call(
        functools.partial(classifier_kernel, num_classes=C),
        out_shape=jax.ShapeDtypeStruct((B, C), jnp.float32),
        grid_spec=pl.GridSpec(
            grid=(n_tiles,),
            in_specs=[
                pl.BlockSpec((TB, D_in), lambda i: (i, 0)),   # x: streamed by batch tile
                pl.BlockSpec((D_in, H), lambda i: (0, 0)),    # w1: VMEM-resident
                pl.BlockSpec((1, H), lambda i: (0, 0)),       # b1: VMEM-resident
                pl.BlockSpec((H, Cp), lambda i: (0, 0)),      # w2 (padded): VMEM-resident
                pl.BlockSpec((1, Cp), lambda i: (0, 0)),      # b2 (padded): VMEM-resident
            ],
            # Narrow output: last dim == full array dim, contiguous per-tile DMA.
            out_specs=pl.BlockSpec((TB, C), lambda i: (i, 0)),
        ),
        compiler_params=pltpu.CompilerParams(
            # Batch tiles are independent -> shard across TensorCores on v7x.
            dimension_semantics=("parallel",),
            vmem_limit_bytes=vmem_limit,
        ),
        cost_estimate=cost,
    )(x, w1, b1, w2p, b2p)

    return out


def init_params(key, input_dim=128, hidden=256, num_classes=2):
    # Deterministic init mimicking PyTorch nn.Linear default (uniform +-1/sqrt(fan_in)).
    k1, k2, k3, k4 = jax.random.split(key, 4)
    lim1 = 1.0 / jnp.sqrt(input_dim)
    lim2 = 1.0 / jnp.sqrt(hidden)
    w1 = jax.random.uniform(k1, (input_dim, hidden), jnp.float32, -lim1, lim1)
    b1 = jax.random.uniform(k2, (1, hidden), jnp.float32, -lim1, lim1)
    w2 = jax.random.uniform(k3, (hidden, num_classes), jnp.float32, -lim2, lim2)
    b2 = jax.random.uniform(k4, (1, num_classes), jnp.float32, -lim2, lim2)
    return w1, b1, w2, b2


def reference(x, w1, b1, w2, b2):
    # Eval-mode dropout == identity.
    return jnp.maximum(x @ w1 + b1, 0.0) @ w2 + b2


if __name__ == "__main__":
    key = jax.random.PRNGKey(0)
    kx, kp, kx2 = jax.random.split(key, 3)

    B, D_in, H, C = 8, 128, 256, 2
    x = jax.random.normal(kx, (B, D_in), jnp.float32)
    w1, b1, w2, b2 = init_params(kp, D_in, H, C)

    # --- f32 path, small batch (single grid step) ---
    out = jax.block_until_ready(classifier_forward(x, w1, b1, w2, b2))
    ref = reference(x, w1, b1, w2, b2)
    assert out.shape == (B, C)
    assert jnp.allclose(out, ref, atol=1e-4, rtol=1e-4)

    # --- f32 path, non-multiple batch with small tile (partial final block masking) ---
    B2 = 37
    x2 = jax.random.normal(kx2, (B2, D_in), jnp.float32)
    out2 = jax.block_until_ready(classifier_forward(x2, w1, b1, w2, b2, tb=16))
    ref2 = reference(x2, w1, b1, w2, b2)
    assert out2.shape == (B2, C)
    assert jnp.allclose(out2, ref2, atol=1e-4, rtol=1e-4)

    # --- f32 path, default tile (exercises the >=2-grid-step split + partial block) ---
    out3 = jax.block_until_ready(classifier_forward(x2, w1, b1, w2, b2))
    assert out3.shape == (B2, C)
    assert jnp.allclose(out3, ref2, atol=1e-4, rtol=1e-4)

    # --- bf16 MXU path (f32 accumulation + f32 epilogue) ---
    out_bf16 = jax.block_until_ready(
        classifier_forward(x2, w1, b1, w2, b2, tb=16, use_bf16=True))
    assert out_bf16.shape == (B2, C)
    assert jnp.allclose(out_bf16, ref2, atol=5e-2, rtol=5e-2)

    print("KERNEL_OK")
</pallas_src>

<mosaic_0001>
module attributes {stable_mosaic.version = 11 : i64} {
  func.func @classifier_kernel(%arg0: i32, %arg1: memref<8x128xf32, #tpu.memory_space<vmem>>, %arg2: memref<128x256xf32, #tpu.memory_space<vmem>>, %arg3: memref<1x256xf32, #tpu.memory_space<vmem>>, %arg4: memref<256x128xf32, #tpu.memory_space<vmem>>, %arg5: memref<1x128xf32, #tpu.memory_space<vmem>>, %arg6: memref<8x2xf32, #tpu.memory_space<vmem>>) attributes {dimension_semantics = [#tpu.dimension_semantics<parallel>], iteration_bounds = array<i64: 1>, scalar_prefetch = 0 : i64, scratch_operands = 0 : i64, tpu.core_type = #tpu.core_type<tc>, window_params = [{transform_indices = @transform_0, window_bounds = array<i64: 8, 128>}, {pipeline_mode = #tpu.pipeline_mode<synchronous>, transform_indices = @transform_1, window_bounds = array<i64: 128, 256>}, {pipeline_mode = #tpu.pipeline_mode<synchronous>, transform_indices = @transform_2, window_bounds = array<i64: 1, 256>}, {pipeline_mode = #tpu.pipeline_mode<synchronous>, transform_indices = @transform_3, window_bounds = array<i64: 256, 128>}, {pipeline_mode = #tpu.pipeline_mode<synchronous>, transform_indices = @transform_4, window_bounds = array<i64: 1, 128>}, {transform_indices = @transform_5, window_bounds = array<i64: 8, 2>}]} {
    %c0 = arith.constant 0 : index
    %c0_0 = arith.constant 0 : index
    %0 = vector.load %arg1[%c0, %c0_0] : memref<8x128xf32, #tpu.memory_space<vmem>>, vector<8x128xf32>
    %c0_1 = arith.constant 0 : index
    %c0_2 = arith.constant 0 : index
    %1 = vector.load %arg2[%c0_1, %c0_2] : memref<128x256xf32, #tpu.memory_space<vmem>>, vector<128x256xf32>
    %cst = arith.constant dense<0.000000e+00> : vector<8x256xf32>
    %2 = tpu.matmul %0, %1, %cst {dimension_numbers = #tpu.dot_dimension_numbers<[1], [0], [0], [1], [0, 0, 1, 1], [], []>} : vector<8x128xf32>, vector<128x256xf32>, vector<8x256xf32> -> vector<8x256xf32>
    %c0_3 = arith.constant 0 : index
    %c0_4 = arith.constant 0 : index
    %3 = vector.load %arg3[%c0_3, %c0_4] : memref<1x256xf32, #tpu.memory_space<vmem>>, vector<1x256xf32>
    %4 = vector.broadcast %3 : vector<1x256xf32> to vector<8x256xf32>
    %5 = arith.addf %2, %4 : vector<8x256xf32>
    %cst_5 = arith.constant 0.000000e+00 : f32
    %6 = vector.broadcast %cst_5 : f32 to vector<8x256xf32>
    %7 = arith.maximumf %5, %6 : vector<8x256xf32>
    %c0_6 = arith.constant 0 : index
    %c0_7 = arith.constant 0 : index
    %8 = vector.load %arg4[%c0_6, %c0_7] : memref<256x128xf32, #tpu.memory_space<vmem>>, vector<256x128xf32>
    %cst_8 = arith.constant dense<0.000000e+00> : vector<8x128xf32>
    %9 = tpu.matmul %7, %8, %cst_8 {dimension_numbers = #tpu.dot_dimension_numbers<[1], [0], [0], [1], [0, 0, 1, 1], [], []>} : vector<8x256xf32>, vector<256x128xf32>, vector<8x128xf32> -> vector<8x128xf32>
    %c0_9 = arith.constant 0 : index
    %c0_10 = arith.constant 0 : index
    %10 = vector.load %arg5[%c0_9, %c0_10] : memref<1x128xf32, #tpu.memory_space<vmem>>, vector<1x128xf32>
    %11 = vector.broadcast %10 : vector<1x128xf32> to vector<8x128xf32>
    %12 = arith.addf %9, %11 : vector<8x128xf32>
    %13 = vector.extract_strided_slice %12 {offsets = [0, 0], sizes = [8, 2], strides = [1, 1]} : vector<8x128xf32> to vector<8x2xf32>
    %c0_11 = arith.constant 0 : index
    %c0_12 = arith.constant 0 : index
    %14 = vector.load %arg6[%c0_11, %c0_12] : memref<8x2xf32, #tpu.memory_space<vmem>>, vector<8x2xf32>
    tpu.vector_store %arg6[%c0_11, %c0_12], %13 {strides = array<i32>} : memref<8x2xf32, #tpu.memory_space<vmem>>, vector<8x2xf32>,
    return
  }
  func.func @transform_0(%arg0: i32) -> (i32, i32) {
    %c0_i32 = arith.constant 0 : i32
    %c0_i32_0 = arith.constant 0 : i32
    return %arg0, %c0_i32 : i32, i32
  }
  func.func @transform_1(%arg0: i32) -> (i32, i32) {
    %c0_i32 = arith.constant 0 : i32
    %c0_i32_0 = arith.constant 0 : i32
    %c0_i32_1 = arith.constant 0 : i32
    return %c0_i32, %c0_i32_0 : i32, i32
  }
  func.func @transform_2(%arg0: i32) -> (i32, i32) {
    %c0_i32 = arith.constant 0 : i32
    %c0_i32_0 = arith.constant 0 : i32
    %c0_i32_1 = arith.constant 0 : i32
    return %c0_i32, %c0_i32_0 : i32, i32
  }
  func.func @transform_3(%arg0: i32) -> (i32, i32) {
    %c0_i32 = arith.constant 0 : i32
    %c0_i32_0 = arith.constant 0 : i32
    %c0_i32_1 = arith.constant 0 : i32
    return %c0_i32, %c0_i32_0 : i32, i32
  }
  func.func @transform_4(%arg0: i32) -> (i32, i32) {
    %c0_i32 = arith.constant 0 : i32
    %c0_i32_0 = arith.constant 0 : i32
    %c0_i32_1 = arith.constant 0 : i32
    return %c0_i32, %c0_i32_0 : i32, i32
  }
  func.func @transform_5(%arg0: i32) -> (i32, i32) {
    %c0_i32 = arith.constant 0 : i32
    %c0_i32_0 = arith.constant 0 : i32
    return %arg0, %c0_i32 : i32, i32
  }
}

</mosaic_0001>

<llo_original>
// kernel: classifier_forward.1
$region0: #{classifier_forward.1}
  #allocation0 [shape = 'u32[]', space=smem, size = 0x4, offset = 0x4, fixed_abs, tag = 'smem constant byte address 0x4 - core index']
  #allocation1 [shape = 'u32[144,128]{1,0:T(1,128)}', space=vmem, size = 0x12000, scoped, tag = 'internal scratch']
  %s0 = inlined_call_operand.vmem [shape: f32[8,128], index: 0, kind: input, shape index: {}]
  %s1 = inlined_call_operand.vmem [shape: f32[128,256], index: 1, kind: input, shape index: {}]
  %s2 = inlined_call_operand.vmem [shape: f32[1,256], index: 2, kind: input, shape index: {}]
  %s3 = inlined_call_operand.vmem [shape: f32[256,128], index: 3, kind: input, shape index: {}]
  %s4 = inlined_call_operand.vmem [shape: f32[1,128], index: 4, kind: input, shape index: {}]
  %s5 = inlined_call_operand.vmem [shape: f32[8,2], index: 5, kind: output, shape index: {}]
  %s6 = sld [smem:[#allocation0]]
  $region30: #{classifier_forward.1} parent=0
    _
  %s8 = ssub.s32 1, %s6
  %s9 = scalar_select 0, %s8, %s6
  // Predicated region
  $region2: #{classifier_forward.1} parent=0 // pred_check
    _
  $region3: #{classifier_forward.1} parent=0 // pred_check_branch
    %11 = sbr.rel (0) target = $region5
  $region4: #{classifier_forward.1} parent=0 // pred_region
    _
  $region5: #{classifier_forward.1} parent=0 // pred_fallthru
    _
  // Predicated region
  $region6: #{classifier_forward.1} parent=0 // pred_check
    _
  $region7: #{classifier_forward.1} parent=0 // pred_check_branch
    %13 = sbr.rel (0) target = $region9
  $region8: #{classifier_forward.1} parent=0 // pred_region
    _
  $region9: #{classifier_forward.1} parent=0 // pred_fallthru
    _
  // Predicated region
  $region10: #{classifier_forward.1} parent=0 // pred_check
    _
  $region11: #{classifier_forward.1} parent=0 // pred_check_branch
    %15 = sbr.rel (0) target = $region13
  $region12: #{classifier_forward.1} parent=0 // pred_region
    _
  $region13: #{classifier_forward.1} parent=0 // pred_fallthru
    _
  // Predicated region
  $region14: #{classifier_forward.1} parent=0 // pred_check
    _
  $region15: #{classifier_forward.1} parent=0 // pred_check_branch
    %17 = sbr.rel (0) target = $region17
  $region16: #{classifier_forward.1} parent=0 // pred_region
    _
  $region17: #{classifier_forward.1} parent=0 // pred_fallthru
    _
  // Predicated region
  $region18: #{classifier_forward.1} parent=0 // pred_check
    _
  $region19: #{classifier_forward.1} parent=0 // pred_check_branch
    %19 = sbr.rel (0) target = $region21
  $region20: #{classifier_forward.1} parent=0 // pred_region
    _
  $region21: #{classifier_forward.1} parent=0 // pred_fallthru
    _
  %v20 = vld [vmem:[%s0] sm:$0xff]
  %v21 = vld [vmem:[%s1] sm:$0xff]
  %v22 = vld [vmem:[%s1 + $0x8] sm:$0xff]
  %v23 = vld [vmem:[%s1 + $0x10] sm:$0xff]
  %v24 = vld [vmem:[%s1 + $0x18] sm:$0xff]
  %v25 = vld [vmem:[%s1 + $0x20] sm:$0xff]
  %v26 = vld [vmem:[%s1 + $0x28] sm:$0xff]
  %v27 = vld [vmem:[%s1 + $0x30] sm:$0xff]
  %v28 = vld [vmem:[%s1 + $0x38] sm:$0xff]
  %v29 = vld [vmem:[%s1 + $0x40] sm:$0xff]
  %v30 = vld [vmem:[%s1 + $0x48] sm:$0xff]
  %v31 = vld [vmem:[%s1 + $0x50] sm:$0xff]
  %v32 = vld [vmem:[%s1 + $0x58] sm:$0xff]
  %v33 = vld [vmem:[%s1 + $0x60] sm:$0xff]
  %v34 = vld [vmem:[%s1 + $0x68] sm:$0xff]
  %v35 = vld [vmem:[%s1 + $0x70] sm:$0xff]
  %v36 = vld [vmem:[%s1 + $0x78] sm:$0xff]
  %v37 = vld [vmem:[%s1 + $0x80] sm:$0xff]
  %v38 = vld [vmem:[%s1 + $0x88] sm:$0xff]
  %v39 = vld [vmem:[%s1 + $0x90] sm:$0xff]
  %v40 = vld [vmem:[%s1 + $0x98] sm:$0xff]
  %v41 = vld [vmem:[%s1 + $0xa0] sm:$0xff]
  %v42 = vld [vmem:[%s1 + $0xa8] sm:$0xff]
  %v43 = vld [vmem:[%s1 + $0xb0] sm:$0xff]
  %v44 = vld [vmem:[%s1 + $0xb8] sm:$0xff]
  %v45 = vld [vmem:[%s1 + $0xc0] sm:$0xff]
  %v46 = vld [vmem:[%s1 + $0xc8] sm:$0xff]
  %v47 = vld [vmem:[%s1 + $0xd0] sm:$0xff]
  %v48 = vld [vmem:[%s1 + $0xd8] sm:$0xff]
  %v49 = vld [vmem:[%s1 + $0xe0] sm:$0xff]
  %v50 = vld [vmem:[%s1 + $0xe8] sm:$0xff]
  %v51 = vld [vmem:[%s1 + $0xf0] sm:$0xff]
  %v52 = vld [vmem:[%s1 + $0xf8] sm:$0xff]
  %v53 = vld [vmem:[%s2] sm:$0x3]
  %v55 = vlaneseq
  %v56 = vshrl.u32 %v55, 7
  %v57 = vsub.s32 0, %v56
  %v58 = vrot.slane %v53, %v57
  %v59 = vlaneseq
  %v60 = vshrl.u32 %v59, 7
  %v61 = vsub.s32 1, %v60
  %v62 = vrot.slane %v53, %v61
  %65 = vmatprep.subr.mxu0 %v22
  %66 = vmatpush1.msra.mxu0 %v21
  %67 = vmatprep.subr.mxu0 %v24
  %68 = vmatpush1.msra.mxu0 %v23
  %69 = vmatprep.subr.mxu0 %v26
  %70 = vmatpush1.msra.mxu0 %v25
  %71 = vmatprep.subr.mxu0 %v28
  %72 = vmatpush1.msra.mxu0 %v27
  %73 = vmatprep.subr.mxu0 %v30
  %74 = vmatpush1.msra.mxu0 %v29
  %75 = vmatprep.subr.mxu0 %v32
  %76 = vmatpush1.msra.mxu0 %v31
  %77 = vmatprep.subr.mxu0 %v34
  %78 = vmatpush1.msra.mxu0 %v33
  %79 = vmatprep.subr.mxu0 %v36
  %80 = vmatpush1.msra.mxu0 %v35
  %81 = vmatprep.subr.mxu0 %v38
  %82 = vmatpush1.msra.mxu0 %v37
  %83 = vmatprep.subr.mxu0 %v40
  %84 = vmatpush1.msra.mxu0 %v39
  %85 = vmatprep.subr.mxu0 %v42
  %86 = vmatpush1.msra.mxu0 %v41
  %87 = vmatprep.subr.mxu0 %v44
  %88 = vmatpush1.msra.mxu0 %v43
  %89 = vmatprep.subr.mxu0 %v46
  %90 = vmatpush1.msra.mxu0 %v45
  %91 = vmatprep.subr.mxu0 %v48
  %92 = vmatpush1.msra.mxu0 %v47
  %93 = vmatprep.subr.mxu0 %v50
  %94 = vmatpush1.msra.mxu0 %v49
  %95 = vmatprep.subr.mxu0 %v52
  %96 = vmatpush1.msra.mxu0 %v51
  %97 = vmatprep.subr.mxu0 0.0
  %98 = vmatpush1.msra.mxu0 0.0
  %99 = vmatprep.subr.mxu0 0.0
  %100 = vmatpush1.msra.mxu0 0.0
  %101 = vmatprep.subr.mxu0 0.0
  %102 = vmatpush1.msra.mxu0 0.0
  %103 = vmatprep.subr.mxu0 0.0
  %104 = vmatpush1.msra.mxu0 0.0
  %105 = vmatprep.subr.mxu0 0.0
  %106 = vmatpush1.msra.mxu0 0.0
  %107 = vmatprep.subr.mxu0 0.0
  %108 = vmatpush1.msra.mxu0 0.0
  %109 = vmatprep.subr.mxu0 0.0
  %110 = vmatpush1.msra.mxu0 0.0
  %111 = vmatprep.subr.mxu0 0.0
  %112 = vmatpush1.msra.mxu0 0.0
  %113 = vmatprep.subr.mxu0 0.0
  %114 = vmatpush1.msra.mxu0 0.0
  %115 = vmatprep.subr.mxu0 0.0
  %116 = vmatpush1.msra.mxu0 0.0
  %117 = vmatprep.subr.mxu0 0.0
  %118 = vmatpush1.msra.mxu0 0.0
  %119 = vmatprep.subr.mxu0 0.0
  %120 = vmatpush1.msra.mxu0 0.0
  %121 = vmatprep.subr.mxu0 0.0
  %122 = vmatpush1.msra.mxu0 0.0
  %123 = vmatprep.subr.mxu0 0.0
  %124 = vmatpush1.msra.mxu0 0.0
  %125 = vmatprep.subr.mxu0 0.0
  %126 = vmatpush1.msra.mxu0 0.0
  %127 = vmatprep.subr.mxu0 0.0
  %128 = vmatpush1.msra.mxu0 0.0
  %129 = vmatprep.mubr.f32.mxu0 0.0
  %130 = vmatmul.mubr.f32.gmra.mrb[0].mxu0 %v20
  %v131 = vpop.f32.mrb[0].mxu0
  %v132 = vadd.f32 %v58, %v131
  %v133 = vpop.f32.mrb[0].mxu0
  %v134 = vadd.f32 %v62, %v133
  %135 = vdwg.mxu0
  %v136 = vmax.f32 %v132, 0.0
  %v137 = vmax.f32 %v134, 0.0
  %v138 = vld [vmem:[%s3] sm:$0xff]
  %v139 = vld [vmem:[%s3 + $0x8] sm:$0xff]
  %v140 = vld [vmem:[%s3 + $0x10] sm:$0xff]
  %v141 = vld [vmem:[%s3 + $0x18] sm:$0xff]
  %v142 = vld [vmem:[%s3 + $0x20] sm:$0xff]
  %v143 = vld [vmem:[%s3 + $0x28] sm:$0xff]
  %v144 = vld [vmem:[%s3 + $0x30] sm:$0xff]
  %v145 = vld [vmem:[%s3 + $0x38] sm:$0xff]
  %v146 = vld [vmem:[%s3 + $0x40] sm:$0xff]
  %v147 = vld [vmem:[%s3 + $0x48] sm:$0xff]
  %v148 = vld [vmem:[%s3 + $0x50] sm:$0xff]
  %v149 = vld [vmem:[%s3 + $0x58] sm:$0xff]
  %v150 = vld [vmem:[%s3 + $0x60] sm:$0xff]
  %v151 = vld [vmem:[%s3 + $0x68] sm:$0xff]
  %v152 = vld [vmem:[%s3 + $0x70] sm:$0xff]
  %v153 = vld [vmem:[%s3 + $0x78] sm:$0xff]
  %v154 = vld [vmem:[%s3 + $0x80] sm:$0xff]
  %v155 = vld [vmem:[%s3 + $0x88] sm:$0xff]
  %v156 = vld [vmem:[%s3 + $0x90] sm:$0xff]
  %v157 = vld [vmem:[%s3 + $0x98] sm:$0xff]
  %v158 = vld [vmem:[%s3 + $0xa0] sm:$0xff]
  %v159 = vld [vmem:[%s3 + $0xa8] sm:$0xff]
  %v160 = vld [vmem:[%s3 + $0xb0] sm:$0xff]
  %v161 = vld [vmem:[%s3 + $0xb8] sm:$0xff]
  %v162 = vld [vmem:[%s3 + $0xc0] sm:$0xff]
  %v163 = vld [vmem:[%s3 + $0xc8] sm:$0xff]
  %v164 = vld [vmem:[%s3 + $0xd0] sm:$0xff]
  %v165 = vld [vmem:[%s3 + $0xd8] sm:$0xff]
  %v166 = vld [vmem:[%s3 + $0xe0] sm:$0xff]
  %v167 = vld [vmem:[%s3 + $0xe8] sm:$0xff]
  %v168 = vld [vmem:[%s3 + $0xf0] sm:$0xff]
  %v169 = vld [vmem:[%s3 + $0xf8] sm:$0xff]
  %v170 = vld [vmem:[%s4] sm:$0x1]
  %v172 = vlaneseq
  %v173 = vshrl.u32 %v172, 7
  %v174 = vsub.s32 0, %v173
  %v175 = vrot.slane %v170, %v174
  %177 = vmatprep.subr.mxu0 0.0
  %178 = vmatpush1.msra.mxu0 %v138
  %179 = vmatprep.subr.mxu0 0.0
  %180 = vmatpush1.msra.mxu0 %v139
  %181 = vmatprep.subr.mxu0 0.0
  %182 = vmatpush1.msra.mxu0 %v140
  %183 = vmatprep.subr.mxu0 0.0
  %184 = vmatpush1.msra.mxu0 %v141
  %185 = vmatprep.subr.mxu0 0.0
  %186 = vmatpush1.msra.mxu0 %v142
  %187 = vmatprep.subr.mxu0 0.0
  %188 = vmatpush1.msra.mxu0 %v143
  %189 = vmatprep.subr.mxu0 0.0
  %190 = vmatpush1.msra.mxu0 %v144
  %191 = vmatprep.subr.mxu0 0.0
  %192 = vmatpush1.msra.mxu0 %v145
  %193 = vmatprep.subr.mxu0 0.0
  %194 = vmatpush1.msra.mxu0 %v146
  %195 = vmatprep.subr.mxu0 0.0
  %196 = vmatpush1.msra.mxu0 %v147
  %197 = vmatprep.subr.mxu0 0.0
  %198 = vmatpush1.msra.mxu0 %v148
  %199 = vmatprep.subr.mxu0 0.0
  %200 = vmatpush1.msra.mxu0 %v149
  %201 = vmatprep.subr.mxu0 0.0
  %202 = vmatpush1.msra.mxu0 %v150
  %203 = vmatprep.subr.mxu0 0.0
  %204 = vmatpush1.msra.mxu0 %v151
  %205 = vmatprep.subr.mxu0 0.0
  %206 = vmatpush1.msra.mxu0 %v152
  %207 = vmatprep.subr.mxu0 0.0
  %208 = vmatpush1.msra.mxu0 %v153
  %209 = vmatprep.subr.mxu0 0.0
  %210 = vmatpush1.msra.mxu0 %v154
  %211 = vmatprep.subr.mxu0 0.0
  %212 = vmatpush1.msra.mxu0 %v155
  %213 = vmatprep.subr.mxu0 0.0
  %214 = vmatpush1.msra.mxu0 %v156
  %215 = vmatprep.subr.mxu0 0.0
  %216 = vmatpush1.msra.mxu0 %v157
  %217 = vmatprep.subr.mxu0 0.0
  %218 = vmatpush1.msra.mxu0 %v158
  %219 = vmatprep.subr.mxu0 0.0
  %220 = vmatpush1.msra.mxu0 %v159
  %221 = vmatprep.subr.mxu0 0.0
  %222 = vmatpush1.msra.mxu0 %v160
  %223 = vmatprep.subr.mxu0 0.0
  %224 = vmatpush1.msra.mxu0 %v161
  %225 = vmatprep.subr.mxu0 0.0
  %226 = vmatpush1.msra.mxu0 %v162
  %227 = vmatprep.subr.mxu0 0.0
  %228 = vmatpush1.msra.mxu0 %v163
  %229 = vmatprep.subr.mxu0 0.0
  %230 = vmatpush1.msra.mxu0 %v164
  %231 = vmatprep.subr.mxu0 0.0
  %232 = vmatpush1.msra.mxu0 %v165
  %233 = vmatprep.subr.mxu0 0.0
  %234 = vmatpush1.msra.mxu0 %v166
  %235 = vmatprep.subr.mxu0 0.0
  %236 = vmatpush1.msra.mxu0 %v167
  %237 = vmatprep.subr.mxu0 0.0
  %238 = vmatpush1.msra.mxu0 %v168
  %239 = vmatprep.subr.mxu0 0.0
  %240 = vmatpush1.msra.mxu0 %v169
  %241 = vmatprep.mubr.f32.mxu0 %v137
  %242 = vmatmul.mubr.f32.gmra.mrb[0].mxu0 %v136
  %v243 = vpop.f32.mrb[0].mxu0
  %v244 = vadd.f32 %v175, %v243
  %v245 = vpop.f32.mrb[0].mxu0
  %246 = vdwg.mxu0
  %vm247 = vcmask 15360
  %248 = vst.msk [vmem:[%s5] sm:$0xff] %vm247, %v244
  // Predicated region
  $region22: #{classifier_forward.1} parent=0 // pred_check
    _
  $region23: #{classifier_forward.1} parent=0 // pred_check_branch
    %250 = sbr.rel (0) target = $region25
  $region24: #{classifier_forward.1} parent=0 // pred_region
    _
  $region25: #{classifier_forward.1} parent=0 // pred_fallthru
    _
  // Predicated region
  $region26: #{classifier_forward.1} parent=0 // pred_check
    _
  $region27: #{classifier_forward.1} parent=0 // pred_check_branch
    %252 = sbr.rel (0) target = $region29
  $region28: #{classifier_forward.1} parent=0 // pred_region
    _
  $region29: #{classifier_forward.1} parent=0 // pred_fallthru
    _

</llo_original>
